<compile_context>
chip_gen: v7x
topology: tpu7x:2x2x1
jax: 0.10.0
libtpu: 0.0.40
codegen_flags: <defaults>
</compile_context>

<pallas_src>
import jax
import jax.numpy as jnp
from jax.experimental import pallas as pl
from jax.experimental.pallas import tpu as pltpu

LANES = 128
SUBLANES = 8


def relation_kernel(x_ref, w1_ref, b1_ref, w2_ref, b2_ref, w3_ref, b3_ref, o_ref):
    # fc1 + relu (bf16 operands, f32 accumulation on the MXU)
    h1 = jnp.dot(x_ref[...], w1_ref[...], preferred_element_type=jnp.float32)
    h1 = jnp.maximum(h1 + b1_ref[...], 0.0)
    # dropout(0.5) is identity at inference time
    # fc2 + relu
    h2 = jnp.dot(h1.astype(jnp.bfloat16), w2_ref[...], preferred_element_type=jnp.float32)
    h2 = jnp.maximum(h2 + b2_ref[...], 0.0)
    # fc3 (lane-dense: N padded to a multiple of 128; padded columns are zero)
    out = jnp.dot(h2.astype(jnp.bfloat16), w3_ref[...], preferred_element_type=jnp.float32)
    o_ref[...] = (out + b3_ref[...]).astype(o_ref.dtype)


def _round_up(a, b):
    return ((a + b - 1) // b) * b


def relation_module_forward(x, params, *, tm=None):
    """Eval-mode forward of relation_module.  x: (B, in_dim)."""
    B, in_dim = x.shape
    width = params["w1"].shape[1]
    hid2 = params["w2"].shape[1]           # 64
    class_num = params["w3"].shape[1]

    # Lane-dense output: pad class_num to a multiple of 128 lanes with zeros.
    cpad = _round_up(class_num, LANES)

    # bf16 weights / activations (halves DMA bytes, native MXU path);
    # f32 biases and f32 accumulation.
    w1 = params["w1"].astype(jnp.bfloat16)
    w2 = params["w2"].astype(jnp.bfloat16)
    w3 = jnp.zeros((hid2, cpad), jnp.bfloat16).at[:, :class_num].set(
        params["w3"].astype(jnp.bfloat16))
    b1 = params["b1"].reshape(1, width).astype(jnp.float32)
    b2 = params["b2"].reshape(1, hid2).astype(jnp.float32)
    b3 = jnp.zeros((1, cpad), jnp.float32).at[:, :class_num].set(
        params["b3"].reshape(1, class_num).astype(jnp.float32))

    # Batch tile: large enough to amortize per-step overhead, 8-aligned,
    # capped so the double-buffered tiles fit v7x's 64 MiB VMEM.
    if tm is None:
        tm = min(512, max(SUBLANES, _round_up(B, SUBLANES)))
    tm = max(SUBLANES, _round_up(tm, SUBLANES))
    b_pad = _round_up(max(B, 1), tm)

    x_p = jnp.zeros((b_pad, in_dim), jnp.bfloat16).at[:B].set(x.astype(jnp.bfloat16))

    grid = (b_pad // tm,)

    # VMEM budget: double-buffered x tile + resident weights/biases +
    # double-buffered lane-dense output tile + f32 intermediates.
    vmem_bytes = (
        2 * tm * in_dim * 2                                    # x (bf16, double-buffered)
        + 2 * tm * cpad * 4                                    # out (f32, double-buffered)
        + (in_dim * width + width * hid2 + hid2 * cpad) * 2    # resident bf16 weights
        + (width + hid2 + cpad) * 4                            # resident f32 biases
        + 3 * tm * max(width, hid2, cpad) * 4                  # h1/h2/out temporaries
    )
    vmem_limit = int(min(max(2 * vmem_bytes, 16 << 20), 48 << 20))

    out = pl.pallas_call(
        relation_kernel,
        out_shape=jax.ShapeDtypeStruct((b_pad, cpad), jnp.float32),
        grid=grid,
        in_specs=[
            pl.BlockSpec((tm, in_dim), lambda i: (i, 0)),      # x: streamed over batch
            pl.BlockSpec((in_dim, width), lambda i: (0, 0)),   # w1: VMEM-resident
            pl.BlockSpec((1, width), lambda i: (0, 0)),        # b1: VMEM-resident
            pl.BlockSpec((width, hid2), lambda i: (0, 0)),     # w2: VMEM-resident
            pl.BlockSpec((1, hid2), lambda i: (0, 0)),         # b2: VMEM-resident
            pl.BlockSpec((hid2, cpad), lambda i: (0, 0)),      # w3 (lane-padded), resident
            pl.BlockSpec((1, cpad), lambda i: (0, 0)),         # b3 (lane-padded), resident
        ],
        out_specs=pl.BlockSpec((tm, cpad), lambda i: (i, 0)),
        compiler_params=pltpu.CompilerParams(
            dimension_semantics=("parallel",),   # batch-parallel: uses both v7x TCs
            vmem_limit_bytes=vmem_limit,
        ),
    )(x_p, w1, b1, w2, b2, w3, b3)

    return out[:B, :class_num]


def init_params(key, in_dim, width, class_num):
    """Matches relation_module.__init__: weights ~ N(0, 0.01), biases = 0.

    Weights stored as (in_features, out_features) — transpose of PyTorch layout —
    so the kernel computes y = x @ W + b directly on the MXU."""
    k1, k2, k3 = jax.random.split(key, 3)
    w1 = 0.01 * jax.random.normal(k1, (in_dim, width), dtype=jnp.float32)
    w2 = 0.01 * jax.random.normal(k2, (width, 64), dtype=jnp.float32)
    w3 = 0.01 * jax.random.normal(k3, (64, class_num), dtype=jnp.float32)
    b1 = jnp.zeros((1, width), dtype=jnp.float32)
    b2 = jnp.zeros((1, 64), dtype=jnp.float32)
    b3 = jnp.zeros((1, class_num), dtype=jnp.float32)
    return {"w1": w1, "b1": b1, "w2": w2, "b2": b2, "w3": w3, "b3": b3}


if __name__ == "__main__":
    # Small shapes consistent with the module; tm=32 to exercise a multi-step grid.
    B, in_dim, width, class_num = 64, 32, 32, 4

    key = jax.random.PRNGKey(0)
    kx, kp = jax.random.split(key)
    x = jax.random.normal(kx, (B, in_dim), dtype=jnp.float32)
    params = init_params(kp, in_dim, width, class_num)

    out = relation_module_forward(x, params, tm=32)
    out = jax.block_until_ready(out)
    assert out.shape == (B, class_num)

    # Pure-JAX reference matching the kernel's mixed precision (bf16 x/W, f32 acc).
    xb = x.astype(jnp.bfloat16)
    w1b = params["w1"].astype(jnp.bfloat16)
    w2b = params["w2"].astype(jnp.bfloat16)
    w3b = params["w3"].astype(jnp.bfloat16)
    h1 = jnp.maximum(
        jnp.dot(xb, w1b, preferred_element_type=jnp.float32) + params["b1"], 0.0)
    h2 = jnp.maximum(
        jnp.dot(h1.astype(jnp.bfloat16), w2b, preferred_element_type=jnp.float32)
        + params["b2"], 0.0)
    ref_bf16 = (jnp.dot(h2.astype(jnp.bfloat16), w3b, preferred_element_type=jnp.float32)
                + params["b3"])
    assert jnp.allclose(out, ref_bf16, atol=1e-5, rtol=1e-2), (
        float(jnp.max(jnp.abs(out - ref_bf16))))

    # Full-f32 reference sanity check (looser tolerance for the bf16 cast).
    h1f = jnp.maximum(x @ params["w1"] + params["b1"], 0.0)
    h2f = jnp.maximum(h1f @ params["w2"] + params["b2"], 0.0)
    ref_f32 = h2f @ params["w3"] + params["b3"]
    assert jnp.allclose(out, ref_f32, atol=1e-4, rtol=5e-2), (
        float(jnp.max(jnp.abs(out - ref_f32))))

    print("KERNEL_OK")
</pallas_src>

<mosaic_0001>
module attributes {stable_mosaic.version = 11 : i64} {
  func.func @relation_kernel(%arg0: i32, %arg1: memref<32x32xbf16, #tpu.memory_space<vmem>>, %arg2: memref<32x32xbf16, #tpu.memory_space<vmem>>, %arg3: memref<1x32xf32, #tpu.memory_space<vmem>>, %arg4: memref<32x64xbf16, #tpu.memory_space<vmem>>, %arg5: memref<1x64xf32, #tpu.memory_space<vmem>>, %arg6: memref<64x128xbf16, #tpu.memory_space<vmem>>, %arg7: memref<1x128xf32, #tpu.memory_space<vmem>>, %arg8: memref<32x128xf32, #tpu.memory_space<vmem>>) attributes {dimension_semantics = [#tpu.dimension_semantics<parallel>], iteration_bounds = array<i64: 2>, scalar_prefetch = 0 : i64, scratch_operands = 0 : i64, tpu.core_type = #tpu.core_type<tc>, window_params = [{transform_indices = @transform_0, window_bounds = array<i64: 32, 32>}, {pipeline_mode = #tpu.pipeline_mode<synchronous>, transform_indices = @transform_1, window_bounds = array<i64: 32, 32>}, {pipeline_mode = #tpu.pipeline_mode<synchronous>, transform_indices = @transform_2, window_bounds = array<i64: 1, 32>}, {pipeline_mode = #tpu.pipeline_mode<synchronous>, transform_indices = @transform_3, window_bounds = array<i64: 32, 64>}, {pipeline_mode = #tpu.pipeline_mode<synchronous>, transform_indices = @transform_4, window_bounds = array<i64: 1, 64>}, {pipeline_mode = #tpu.pipeline_mode<synchronous>, transform_indices = @transform_5, window_bounds = array<i64: 64, 128>}, {pipeline_mode = #tpu.pipeline_mode<synchronous>, transform_indices = @transform_6, window_bounds = array<i64: 1, 128>}, {transform_indices = @transform_7, window_bounds = array<i64: 32, 128>}]} {
    %c0 = arith.constant 0 : index
    %c0_0 = arith.constant 0 : index
    %0 = vector.load %arg1[%c0, %c0_0] : memref<32x32xbf16, #tpu.memory_space<vmem>>, vector<32x32xbf16>
    %c0_1 = arith.constant 0 : index
    %c0_2 = arith.constant 0 : index
    %1 = vector.load %arg2[%c0_1, %c0_2] : memref<32x32xbf16, #tpu.memory_space<vmem>>, vector<32x32xbf16>
    %cst = arith.constant dense<0.000000e+00> : vector<32x32xf32>
    %2 = tpu.matmul %0, %1, %cst {dimension_numbers = #tpu.dot_dimension_numbers<[1], [0], [0], [1], [0, 0, 1, 1], [], []>} : vector<32x32xbf16>, vector<32x32xbf16>, vector<32x32xf32> -> vector<32x32xf32>
    %c0_3 = arith.constant 0 : index
    %c0_4 = arith.constant 0 : index
    %3 = vector.load %arg3[%c0_3, %c0_4] : memref<1x32xf32, #tpu.memory_space<vmem>>, vector<1x32xf32>
    %4 = vector.broadcast %3 : vector<1x32xf32> to vector<32x32xf32>
    %5 = arith.addf %2, %4 : vector<32x32xf32>
    %cst_5 = arith.constant 0.000000e+00 : f32
    %6 = vector.broadcast %cst_5 : f32 to vector<32x32xf32>
    %7 = arith.maximumf %5, %6 : vector<32x32xf32>
    %8 = arith.truncf %7 : vector<32x32xf32> to vector<32x32xbf16>
    %c0_6 = arith.constant 0 : index
    %c0_7 = arith.constant 0 : index
    %9 = vector.load %arg4[%c0_6, %c0_7] : memref<32x64xbf16, #tpu.memory_space<vmem>>, vector<32x64xbf16>
    %cst_8 = arith.constant dense<0.000000e+00> : vector<32x64xf32>
    %10 = tpu.matmul %8, %9, %cst_8 {dimension_numbers = #tpu.dot_dimension_numbers<[1], [0], [0], [1], [0, 0, 1, 1], [], []>} : vector<32x32xbf16>, vector<32x64xbf16>, vector<32x64xf32> -> vector<32x64xf32>
    %c0_9 = arith.constant 0 : index
    %c0_10 = arith.constant 0 : index
    %11 = vector.load %arg5[%c0_9, %c0_10] : memref<1x64xf32, #tpu.memory_space<vmem>>, vector<1x64xf32>
    %12 = vector.broadcast %11 : vector<1x64xf32> to vector<32x64xf32>
    %13 = arith.addf %10, %12 : vector<32x64xf32>
    %cst_11 = arith.constant 0.000000e+00 : f32
    %14 = vector.broadcast %cst_11 : f32 to vector<32x64xf32>
    %15 = arith.maximumf %13, %14 : vector<32x64xf32>
    %16 = arith.truncf %15 : vector<32x64xf32> to vector<32x64xbf16>
    %c0_12 = arith.constant 0 : index
    %c0_13 = arith.constant 0 : index
    %17 = vector.load %arg6[%c0_12, %c0_13] : memref<64x128xbf16, #tpu.memory_space<vmem>>, vector<64x128xbf16>
    %cst_14 = arith.constant dense<0.000000e+00> : vector<32x128xf32>
    %18 = tpu.matmul %16, %17, %cst_14 {dimension_numbers = #tpu.dot_dimension_numbers<[1], [0], [0], [1], [0, 0, 1, 1], [], []>} : vector<32x64xbf16>, vector<64x128xbf16>, vector<32x128xf32> -> vector<32x128xf32>
    %c0_15 = arith.constant 0 : index
    %c0_16 = arith.constant 0 : index
    %19 = vector.load %arg7[%c0_15, %c0_16] : memref<1x128xf32, #tpu.memory_space<vmem>>, vector<1x128xf32>
    %20 = vector.broadcast %19 : vector<1x128xf32> to vector<32x128xf32>
    %21 = arith.addf %18, %20 : vector<32x128xf32>
    %c0_17 = arith.constant 0 : index
    %c0_18 = arith.constant 0 : index
    %22 = vector.load %arg8[%c0_17, %c0_18] : memref<32x128xf32, #tpu.memory_space<vmem>>, vector<32x128xf32>
    tpu.vector_store %arg8[%c0_17, %c0_18], %21 {strides = array<i32>} : memref<32x128xf32, #tpu.memory_space<vmem>>, vector<32x128xf32>,
    return
  }
  func.func @transform_0(%arg0: i32) -> (i32, i32) {
    %c0_i32 = arith.constant 0 : i32
    %c0_i32_0 = arith.constant 0 : i32
    return %arg0, %c0_i32 : i32, i32
  }
  func.func @transform_1(%arg0: i32) -> (i32, i32) {
    %c0_i32 = arith.constant 0 : i32
    %c0_i32_0 = arith.constant 0 : i32
    %c0_i32_1 = arith.constant 0 : i32
    return %c0_i32, %c0_i32_0 : i32, i32
  }
  func.func @transform_2(%arg0: i32) -> (i32, i32) {
    %c0_i32 = arith.constant 0 : i32
    %c0_i32_0 = arith.constant 0 : i32
    %c0_i32_1 = arith.constant 0 : i32
    return %c0_i32, %c0_i32_0 : i32, i32
  }
  func.func @transform_3(%arg0: i32) -> (i32, i32) {
    %c0_i32 = arith.constant 0 : i32
    %c0_i32_0 = arith.constant 0 : i32
    %c0_i32_1 = arith.constant 0 : i32
    return %c0_i32, %c0_i32_0 : i32, i32
  }
  func.func @transform_4(%arg0: i32) -> (i32, i32) {
    %c0_i32 = arith.constant 0 : i32
    %c0_i32_0 = arith.constant 0 : i32
    %c0_i32_1 = arith.constant 0 : i32
    return %c0_i32, %c0_i32_0 : i32, i32
  }
  func.func @transform_5(%arg0: i32) -> (i32, i32) {
    %c0_i32 = arith.constant 0 : i32
    %c0_i32_0 = arith.constant 0 : i32
    %c0_i32_1 = arith.constant 0 : i32
    return %c0_i32, %c0_i32_0 : i32, i32
  }
  func.func @transform_6(%arg0: i32) -> (i32, i32) {
    %c0_i32 = arith.constant 0 : i32
    %c0_i32_0 = arith.constant 0 : i32
    %c0_i32_1 = arith.constant 0 : i32
    return %c0_i32, %c0_i32_0 : i32, i32
  }
  func.func @transform_7(%arg0: i32) -> (i32, i32) {
    %c0_i32 = arith.constant 0 : i32
    %c0_i32_0 = arith.constant 0 : i32
    return %arg0, %c0_i32 : i32, i32
  }
}

</mosaic_0001>

<llo_original>
// kernel: tpu_custom_call.1
$region0: #{tpu_custom_call.1}
  #allocation0 [shape = 'u32[]', space=smem, size = 0x4, offset = 0x4, fixed_abs, tag = 'smem constant byte address 0x4 - core index']
  #allocation1 [shape = 'u32[144,128]{1,0:T(1,128)}', space=vmem, size = 0x12000, scoped, tag = 'internal scratch']
  %s0 = inlined_call_operand.vmem [shape: bf16[64,32], index: 0, kind: input, shape index: {}]
  %s1 = inlined_call_operand.vmem [shape: bf16[32,32], index: 1, kind: input, shape index: {}]
  %s2 = inlined_call_operand.vmem [shape: f32[1,32], index: 2, kind: input, shape index: {}]
  %s3 = inlined_call_operand.hbm [shape: bf16[32,64], index: 3, kind: input, shape index: {}]
  %s4 = inlined_call_operand.vmem [shape: f32[1,64], index: 4, kind: input, shape index: {}]
  %s5 = inlined_call_operand.vmem [shape: bf16[64,128], index: 5, kind: input, shape index: {}]
  %s6 = inlined_call_operand.vmem [shape: f32[1,128], index: 6, kind: input, shape index: {}]
  %s7 = inlined_call_operand.hbm [shape: f32[64,128], index: 7, kind: output, shape index: {}]
  %s8 = sld [smem:[#allocation0]]
  $region65: #{tpu_custom_call.1} parent=0
    _
  %s10 = ssub.s32 1, %s8
  %s11 = scalar_select 0, %s10, %s8
  $region1: #{tpu_custom_call.1} parent=0
    #allocation2 [shape = 'u8[8192]{0}', space=vmem, size = 0x2000, scoped, tag = 'input window, operand 3, single buffered']
    #allocation3 [shape = 's32[2]{0}', space=sflag, size = 0x8, scoped, tag = 'scoped memory for tpu_custom_call.1']
    #allocation4 [shape = 's32[2]{0}', space=sflag, size = 0x8, scoped, tag = 'scoped memory for tpu_custom_call.1']
    #allocation5 [shape = 'u8[32768]{0}', space=vmem, size = 0x8000, scoped, tag = 'output window, operand 0']
    %12 = vsyncpa [#allocation3], 0
    %13 = vsyncpa [#allocation4], 0
    %s14 = scalar_lea.sflag [#allocation4], 1
    %15 = vsyncpa %s14, 0
    loop: start=0, step=1, limit=4
    $region2: #{tpu_custom_call.1} parent=1 // loop_pre_header
      _
    $region3: #{tpu_custom_call.1} parent=1 // loop_header
      %s17 = sphi 0, %s21
      %p18 = scmp.ge.s32.totalorder %s17, 4
      %s27 = sphi 0, %s29
      %s30 = sphi 0, %s27
      %s31 = sphi 0, %s30
      %s47 = sphi 0, %s31
      %s51 = sphi 0, %s51
      %s53 = sphi 0, %s51
      %s54 = sphi 0, %s53
      %s68 = sphi 0, %s54
      %s72 = sphi 0, %s72
      %s74 = sphi 0, %s72
      %s75 = sphi 0, %s74
      %s89 = sphi 0, %s75
      %s93 = sphi 0, %s93
      %s95 = sphi 0, %s93
      %s96 = sphi 0, %s95
      %s110 = sphi 0, %s96
      %s114 = sphi 0, %s114
      %s116 = sphi 0, %s114
      %s117 = sphi 0, %s116
      %s131 = sphi 0, %s117
      %s135 = sphi 0, %s135
      %s137 = sphi 0, %s135
      %s138 = sphi 0, %s137
      %s152 = sphi 0, %s138
      %s156 = sphi 0, %s156
      %s158 = sphi 0, %s156
      %s159 = sphi 0, %s158
      %s173 = sphi 0, %s159
      %s179 = sphi 0, %s181
      %s182 = sphi 0, %s179
      %s183 = sphi 0, %s182
      %s199 = sphi 0, %s183
    $region4: #{tpu_custom_call.1} parent=1 // loop_header_branch
      %20 = sbr.rel (%p18) target = $region8
    $region5: #{tpu_custom_call.1} parent=1 // loop_body
      %s22 = ssub.s32 %s17, 1
      %s23 = ssub.s32 %s17, 2
      %s24 = sadd.s32 %s17, 1
      %s25 = ssub.s32 %s17, %s24
      %p26 = scmp.eq.s32.totalorder %s25, 0
      %s28 = sadd.s32 %s27, 1
      %s29 = scalar_select %p26, %s27, %s28
      %p32 = pneg %p26
      %p33 = scmp.eq.s32.totalorder %s17, 1
      %p34 = por %p32, %p33
      %p35 = scmp.ne.s32.totalorder %s27, %s30
      %p36 = scmp.eq.s32.totalorder %s17, 0
      %p37 = por %p35, %p36
      %p38 = scmp.ne.s32.totalorder %s27, %s30
      %p39 = scmp.eq.s32.totalorder %s22, 1
      %p40 = por %p38, %p39
      %p41 = scmp.ne.s32.totalorder %s30, %s31
      %p42 = scmp.eq.s32.totalorder %s22, 0
      %p43 = por %p41, %p42
      %p44 = scmp.ne.s32.totalorder %s30, %s31
      %p45 = scmp.eq.s32.totalorder %s23, 1
      %p46 = por %p44, %p45
      %p48 = scmp.ne.s32.totalorder %s31, %s47
      %p49 = scmp.eq.s32.totalorder %s23, 0
      %p50 = por %p48, %p49
      %s52 = sadd.s32 %s51, 1
      %p55 = scmp.eq.s32.totalorder %s17, 1
      %p56 = scmp.ne.s32.totalorder %s51, %s53
      %p57 = scmp.eq.s32.totalorder %s17, 0
      %p58 = por %p56, %p57
      %p59 = scmp.ne.s32.totalorder %s51, %s53
      %p60 = scmp.eq.s32.totalorder %s22, 1
      %p61 = por %p59, %p60
      %p62 = scmp.ne.s32.totalorder %s53, %s54
      %p63 = scmp.eq.s32.totalorder %s22, 0
      %p64 = por %p62, %p63
      %p65 = scmp.ne.s32.totalorder %s53, %s54
      %p66 = scmp.eq.s32.totalorder %s23, 1
      %p67 = por %p65, %p66
      %p69 = scmp.ne.s32.totalorder %s54, %s68
      %p70 = scmp.eq.s32.totalorder %s23, 0
      %p71 = por %p69, %p70
      %s73 = sadd.s32 %s72, 1
      %p76 = scmp.eq.s32.totalorder %s17, 1
      %p77 = scmp.ne.s32.totalorder %s72, %s74
      %p78 = scmp.eq.s32.totalorder %s17, 0
      %p79 = por %p77, %p78
      %p80 = scmp.ne.s32.totalorder %s72, %s74
      %p81 = scmp.eq.s32.totalorder %s22, 1
      %p82 = por %p80, %p81
      %p83 = scmp.ne.s32.totalorder %s74, %s75
      %p84 = scmp.eq.s32.totalorder %s22, 0
      %p85 = por %p83, %p84
      %p86 = scmp.ne.s32.totalorder %s74, %s75
      %p87 = scmp.eq.s32.totalorder %s23, 1
      %p88 = por %p86, %p87
      %p90 = scmp.ne.s32.totalorder %s75, %s89
      %p91 = scmp.eq.s32.totalorder %s23, 0
      %p92 = por %p90, %p91
      %s94 = sadd.s32 %s93, 1
      %p97 = scmp.eq.s32.totalorder %s17, 1
      %p98 = scmp.ne.s32.totalorder %s93, %s95
      %p99 = scmp.eq.s32.totalorder %s17, 0
      %p100 = por %p98, %p99
      %p101 = scmp.ne.s32.totalorder %s93, %s95
      %p102 = scmp.eq.s32.totalorder %s22, 1
      %p103 = por %p101, %p102
      %p104 = scmp.ne.s32.totalorder %s95, %s96
      %p105 = scmp.eq.s32.totalorder %s22, 0
      %p106 = por %p104, %p105
      %p107 = scmp.ne.s32.totalorder %s95, %s96
      %p108 = scmp.eq.s32.totalorder %s23, 1
      %p109 = por %p107, %p108
      %p111 = scmp.ne.s32.totalorder %s96, %s110
      %p112 = scmp.eq.s32.totalorder %s23, 0
      %p113 = por %p111, %p112
      %s115 = sadd.s32 %s114, 1
      %p118 = scmp.eq.s32.totalorder %s17, 1
      %p119 = scmp.ne.s32.totalorder %s114, %s116
      %p120 = scmp.eq.s32.totalorder %s17, 0
      %p121 = por %p119, %p120
      %p122 = scmp.ne.s32.totalorder %s114, %s116
      %p123 = scmp.eq.s32.totalorder %s22, 1
      %p124 = por %p122, %p123
      %p125 = scmp.ne.s32.totalorder %s116, %s117
      %p126 = scmp.eq.s32.totalorder %s22, 0
      %p127 = por %p125, %p126
      %p128 = scmp.ne.s32.totalorder %s116, %s117
      %p129 = scmp.eq.s32.totalorder %s23, 1
      %p130 = por %p128, %p129
      %p132 = scmp.ne.s32.totalorder %s117, %s131
      %p133 = scmp.eq.s32.totalorder %s23, 0
      %p134 = por %p132, %p133
      %s136 = sadd.s32 %s135, 1
      %p139 = scmp.eq.s32.totalorder %s17, 1
      %p140 = scmp.ne.s32.totalorder %s135, %s137
      %p141 = scmp.eq.s32.totalorder %s17, 0
      %p142 = por %p140, %p141
      %p143 = scmp.ne.s32.totalorder %s135, %s137
      %p144 = scmp.eq.s32.totalorder %s22, 1
      %p145 = por %p143, %p144
      %p146 = scmp.ne.s32.totalorder %s137, %s138
      %p147 = scmp.eq.s32.totalorder %s22, 0
      %p148 = por %p146, %p147
      %p149 = scmp.ne.s32.totalorder %s137, %s138
      %p150 = scmp.eq.s32.totalorder %s23, 1
      %p151 = por %p149, %p150
      %p153 = scmp.ne.s32.totalorder %s138, %s152
      %p154 = scmp.eq.s32.totalorder %s23, 0
      %p155 = por %p153, %p154
      %s157 = sadd.s32 %s156, 1
      %p160 = scmp.eq.s32.totalorder %s17, 1
      %p161 = scmp.ne.s32.totalorder %s156, %s158
      %p162 = scmp.eq.s32.totalorder %s17, 0
      %p163 = por %p161, %p162
      %p164 = scmp.ne.s32.totalorder %s156, %s158
      %p165 = scmp.eq.s32.totalorder %s22, 1
      %p166 = por %p164, %p165
      %p167 = scmp.ne.s32.totalorder %s158, %s159
      %p168 = scmp.eq.s32.totalorder %s22, 0
      %p169 = por %p167, %p168
      %p170 = scmp.ne.s32.totalorder %s158, %s159
      %p171 = scmp.eq.s32.totalorder %s23, 1
      %p172 = por %p170, %p171
      %p174 = scmp.ne.s32.totalorder %s159, %s173
      %p175 = scmp.eq.s32.totalorder %s23, 0
      %p176 = por %p174, %p175
      %s177 = ssub.s32 %s17, %s24
      %p178 = scmp.eq.s32.totalorder %s177, 0
      %s180 = sadd.s32 %s179, 1
      %s181 = scalar_select %p178, %s179, %s180
      %p184 = pneg %p178
      %p185 = scmp.eq.s32.totalorder %s17, 1
      %p186 = por %p184, %p185
      %p187 = scmp.ne.s32.totalorder %s179, %s182
      %p188 = scmp.eq.s32.totalorder %s17, 0
      %p189 = por %p187, %p188
      %p190 = scmp.ne.s32.totalorder %s179, %s182
      %p191 = scmp.eq.s32.totalorder %s22, 1
      %p192 = por %p190, %p191
      %p193 = scmp.ne.s32.totalorder %s182, %s183
      %p194 = scmp.eq.s32.totalorder %s22, 0
      %p195 = por %p193, %p194
      %p196 = scmp.ne.s32.totalorder %s182, %s183
      %p197 = scmp.eq.s32.totalorder %s23, 1
      %p198 = por %p196, %p197
      %p200 = scmp.ne.s32.totalorder %s183, %s199
      %p201 = scmp.eq.s32.totalorder %s23, 0
      %p202 = por %p200, %p201
      %p203 = scmp.le.s32.totalorder 1, %s17
      %p204 = scmp.lt.s32.totalorder %s17, 3
      %p205 = pnand %p203, %p204
      %p206 = pneg %p205
      // Predicated region
      $region9: #{tpu_custom_call.1} parent=5 // pred_check
        _
      $region10: #{tpu_custom_call.1} parent=5 // pred_check_branch
        %208 = sbr.rel (%p205) target = $region12
      $region11: #{tpu_custom_call.1} parent=5 // pred_region
        %s209 = ssub.s32 %s17, 1
        // Predicated region
        $region13: #{tpu_custom_call.1} parent=11 // pred_check
          %p210 = pneg %p64
        $region14: #{tpu_custom_call.1} parent=11 // pred_check_branch
          %212 = sbr.rel (%p210) target = $region16
        $region15: #{tpu_custom_call.1} parent=11 // pred_region
          _
        $region16: #{tpu_custom_call.1} parent=11 // pred_fallthru
          _
        // Predicated region
        $region17: #{tpu_custom_call.1} parent=11 // pred_check
          %p213 = pneg %p85
        $region18: #{tpu_custom_call.1} parent=11 // pred_check_branch
          %215 = sbr.rel (%p213) target = $region20
        $region19: #{tpu_custom_call.1} parent=11 // pred_region
          _
        $region20: #{tpu_custom_call.1} parent=11 // pred_fallthru
          _
        // Predicated region
        $region21: #{tpu_custom_call.1} parent=11 // pred_check
          %p216 = pneg %p106
        $region22: #{tpu_custom_call.1} parent=11 // pred_check_branch
          %218 = sbr.rel (%p216) target = $region24
        $region23: #{tpu_custom_call.1} parent=11 // pred_region
          %s220 = ssub.s32 256, 256
          %221 = vsyncadd [#allocation3], %s220
          %s222 = sshll.u32 [#allocation2], 4
          %s223 = int_to_ptr.vmem [resolvable:$true] %s222
          %228 = dma.hbm_to_vmem [thread:$0]  %s3, 256, %s223, [#allocation3], 64, 64, 4
        $region24: #{tpu_custom_call.1} parent=11 // pred_fallthru
          _
        // Predicated region
        $region25: #{tpu_custom_call.1} parent=11 // pred_check
          %p229 = pneg %p127
        $region26: #{tpu_custom_call.1} parent=11 // pred_check_branch
          %231 = sbr.rel (%p229) target = $region28
        $region27: #{tpu_custom_call.1} parent=11 // pred_region
          _
        $region28: #{tpu_custom_call.1} parent=11 // pred_fallthru
          _
        // Predicated region
        $region29: #{tpu_custom_call.1} parent=11 // pred_check
          %p232 = pneg %p148
        $region30: #{tpu_custom_call.1} parent=11 // pred_check_branch
          %234 = sbr.rel (%p232) target = $region32
        $region31: #{tpu_custom_call.1} parent=11 // pred_region
          _
        $region32: #{tpu_custom_call.1} parent=11 // pred_fallthru
          _
        // Predicated region
        $region33: #{tpu_custom_call.1} parent=11 // pred_check
          %p235 = pneg %p169
        $region34: #{tpu_custom_call.1} parent=11 // pred_check_branch
          %237 = sbr.rel (%p235) target = $region36
        $region35: #{tpu_custom_call.1} parent=11 // pred_region
          _
        $region36: #{tpu_custom_call.1} parent=11 // pred_fallthru
          _
      $region12: #{tpu_custom_call.1} parent=5 // pred_fallthru
        _
      %p238 = scmp.lt.s32.totalorder %s17, 2
      // Predicated region
      $region37: #{tpu_custom_call.1} parent=5 // pred_check
        %p239 = pneg %p238
      $region38: #{tpu_custom_call.1} parent=5 // pred_check_branch
        %241 = sbr.rel (%p239) target = $region40
      $region39: #{tpu_custom_call.1} parent=5 // pred_region
        // Predicated region
        $region41: #{tpu_custom_call.1} parent=39 // pred_check
          %p242 = pneg %p37
        $region42: #{tpu_custom_call.1} parent=39 // pred_check_branch
          %244 = sbr.rel (%p242) target = $region44
        $region43: #{tpu_custom_call.1} parent=39 // pred_region
          %s245 = smul.u32 4, %s17
          %p246 = scmp.lt.s32.totalorder %s245, 7
          %s247 = scalar_select %p246, %s245, 7
          %s248 = smul.addr %s247, 4
          %s249 = scalar_lea.vmem %s0, %s248
          %s250 = smul.u32 4, %s17
        $region44: #{tpu_custom_call.1} parent=39 // pred_fallthru
          _
      $region40: #{tpu_custom_call.1} parent=5 // pred_fallthru
        _
      %p251 = scmp.le.s32.totalorder 1, %s17
      %p252 = scmp.lt.s32.totalorder %s17, 3
      %p253 = pnand %p251, %p252
      %p254 = pneg %p253
      // Predicated region
      $region45: #{tpu_custom_call.1} parent=5 // pred_check
        _
      $region46: #{tpu_custom_call.1} parent=5 // pred_check_branch
        %256 = sbr.rel (%p253) target = $region48
      $region47: #{tpu_custom_call.1} parent=5 // pred_region
        %s257 = ssub.s32 %s17, 1
        // Predicated region
        $region49: #{tpu_custom_call.1} parent=47 // pred_check
          %p258 = pneg %p106
        $region50: #{tpu_custom_call.1} parent=47 // pred_check_branch
          %260 = sbr.rel (%p258) target = $region52
        $region51: #{tpu_custom_call.1} parent=47 // pred_region
          %261 = dma.done [#allocation3], 256
        $region52: #{tpu_custom_call.1} parent=47 // pred_fallthru
          _
        %s262 = smul.u32 4, %s22
        %p263 = scmp.lt.s32.totalorder %s262, 7
        %s264 = scalar_select %p263, %s262, 7
        %s265 = smul.addr %s264, 4
        %s266 = scalar_lea.vmem %s0, %s265
        %p267 = pneg %p43
        %p268 = pneg %p40
        %p269 = pneg %p64
        %p270 = pneg %p61
        %p271 = pneg %p85
        %p272 = pneg %p82
        %p273 = pneg %p106
        %p274 = pneg %p103
        %p275 = pneg %p127
        %p276 = pneg %p124
        %p277 = pneg %p148
        %p278 = pneg %p145
        %p279 = pneg %p169
        %p280 = pneg %p166
        %p281 = pneg %p195
        %p282 = pneg %p192
        %s283 = sand.u32 %s182, 1
        %s284 = scalar_lea.sflag [#allocation4], %s283
        %s285 = sand.u32 %s182, 1
        %s286 = smul.addr %s285, 32
        %s287 = scalar_lea.vmem [#allocation5], %s286
        %s288 = smul.u32 4, %s22
        %p289 = scmp.lt.s32.totalorder %s288, 7
        %s290 = scalar_select %p289, %s288, 7
        %s291 = smul.addr %s290, 4
        %s292 = scalar_lea.vmem %s0, %s291
        %s293 = smul.u32 4, %s22
        %s294 = smul.u32 4, %s22
        %v296 = vld [vmem:[%s292] sm:$0xf]
        %v297 = vld [vmem:[%s292 + $0x4] sm:$0xf]
        %v298 = vld [vmem:[%s292 + $0x8] sm:$0xf]
        %v299 = vld [vmem:[%s292 + $0xc] sm:$0xf]
        %v300 = vld [vmem:[%s1] sm:$0xf]
        %v301 = vld [vmem:[%s1 + $0x4] sm:$0xf]
        %v302 = vld [vmem:[%s1 + $0x8] sm:$0xf]
        %v303 = vld [vmem:[%s1 + $0xc] sm:$0xf]
        %v304 = vld [vmem:[%s2] sm:$0x1]
        %v306 = vlaneseq
        %v307 = vshrl.u32 %v306, 7
        %v308 = vsub.s32 0, %v307
        %v309 = vrot.slane %v304, %v308
        %v315 = vunpack.c.l.b16 %v296
        %v316 = vunpack.c.l.b16 %v297
        %v317 = vunpack.c.l.b16 %v298
        %v318 = vunpack.c.l.b16 %v299
        %v319 = vpack.c.b16 %v316, %v315
        %v320 = vpack.c.b16 %v318, %v317
        %v325 = vunpack.c.l.b16 %v300
        %v326 = vunpack.c.l.b16 %v301
        %v327 = vunpack.c.l.b16 %v302
        %v328 = vunpack.c.l.b16 %v303
        %v329 = vpack.c.b16 %v326, %v325
        %v330 = vpack.c.b16 %v328, %v327
        %vm333 = vcmask 261120
        %v335 = vsel %vm333, %v319, 0
        %v338 = vsel %vm333, %v320, 0
        %340 = vmatprep.subr.bf16.mxu0 0
        %341 = vmatpush1.bf16.msra.mxu0 %v329
        %342 = vmatprep.subr.bf16.mxu0 0
        %343 = vmatpush1.bf16.msra.mxu0 %v330
        %344 = vmatprep.subr.bf16.mxu0 0
        %345 = vmatpush1.bf16.msra.mxu0 0
        %346 = vmatprep.subr.bf16.mxu0 0
        %347 = vmatpush1.bf16.msra.mxu0 0
        %348 = vmatprep.subr.bf16.mxu0 0
        %349 = vmatpush1.bf16.msra.mxu0 0
        %350 = vmatprep.subr.bf16.mxu0 0
        %351 = vmatpush1.bf16.msra.mxu0 0
        %352 = vmatprep.subr.bf16.mxu0 0
        %353 = vmatpush1.bf16.msra.mxu0 0
        %354 = vmatprep.subr.bf16.mxu0 0
        %355 = vmatpush1.bf16.msra.mxu0 0
        %356 = vmatprep.subr.bf16.mxu0 0
        %357 = vmatpush1.bf16.msra.mxu0 0
        %358 = vmatprep.subr.bf16.mxu0 0
        %359 = vmatpush1.bf16.msra.mxu0 0
        %360 = vmatprep.subr.bf16.mxu0 0
        %361 = vmatpush1.bf16.msra.mxu0 0
        %362 = vmatprep.subr.bf16.mxu0 0
        %363 = vmatpush1.bf16.msra.mxu0 0
        %364 = vmatprep.subr.bf16.mxu0 0
        %365 = vmatpush1.bf16.msra.mxu0 0
        %366 = vmatprep.subr.bf16.mxu0 0
        %367 = vmatpush1.bf16.msra.mxu0 0
        %368 = vmatprep.subr.bf16.mxu0 0
        %369 = vmatpush1.bf16.msra.mxu0 0
        %370 = vmatprep.subr.bf16.mxu0 0
        %371 = vmatpush1.bf16.msra.mxu0 0
        %372 = vmatprep.mubr.bf16.mxu0 0
        %373 = vmatmul.mubr.bf16.gmra.mrb[0].mxu0 %v335
        %v374 = vpop.f32.mrb[0].mxu0
        %v375 = vadd.f32 %v309, %v374
        %v376 = vpop.f32.mrb[0].mxu0
        %v377 = vpop.f32.mrb[0].mxu0
        %v378 = vadd.f32 %v309, %v377
        %v379 = vpop.f32.mrb[0].mxu0
        %380 = vmatprep.mubr.bf16.mxu0 0
        %381 = vmatmul.mubr.bf16.gmra.mrb[0].mxu0 %v338
        %v382 = vpop.f32.mrb[0].mxu0
        %v383 = vadd.f32 %v309, %v382
        %v384 = vpop.f32.mrb[0].mxu0
        %v385 = vpop.f32.mrb[0].mxu0
        %v386 = vadd.f32 %v309, %v385
        %v387 = vpop.f32.mrb[0].mxu0
        %388 = vdwg.mxu0
        %v389 = vmax.f32 %v375, 0.0
        %v390 = vmax.f32 %v378, 0.0
        %v391 = vmax.f32 %v383, 0.0
        %v392 = vmax.f32 %v386, 0.0
        %v393 = vpack.c.bf16 %v390, %v389
        %v394 = vpack.c.bf16 %v392, %v391
        %v395 = vld [vmem:[#allocation2] sm:$0xf]
        %v396 = vld [vmem:[#allocation2 + $0x4] sm:$0xf]
        %v397 = vld [vmem:[#allocation2 + $0x8] sm:$0xf]
        %v398 = vld [vmem:[#allocation2 + $0xc] sm:$0xf]
        %v399 = vld [vmem:[%s4] sm:$0x1]
        %v401 = vlaneseq
        %v402 = vshrl.u32 %v401, 7
        %v403 = vsub.s32 0, %v402
        %v404 = vrot.slane %v399, %v403
        %v410 = vunpack.c.l.b16 %v395
        %v411 = vunpack.c.l.b16 %v396
        %v412 = vunpack.c.l.b16 %v397
        %v413 = vunpack.c.l.b16 %v398
        %v414 = vpack.c.b16 %v411, %v410
        %v415 = vpack.c.b16 %v413, %v412
        %v419 = vsel %vm333, %v393, 0
        %v422 = vsel %vm333, %v394, 0
        %424 = vmatprep.subr.bf16.mxu0 0
        %425 = vmatpush1.bf16.msra.mxu0 %v414
        %426 = vmatprep.subr.bf16.mxu0 0
        %427 = vmatpush1.bf16.msra.mxu0 %v415
        %428 = vmatprep.subr.bf16.mxu0 0
        %429 = vmatpush1.bf16.msra.mxu0 0
        %430 = vmatprep.subr.bf16.mxu0 0
        %431 = vmatpush1.bf16.msra.mxu0 0
        %432 = vmatprep.subr.bf16.mxu0 0
        %433 = vmatpush1.bf16.msra.mxu0 0
        %434 = vmatprep.subr.bf16.mxu0 0
        %435 = vmatpush1.bf16.msra.mxu0 0
        %436 = vmatprep.subr.bf16.mxu0 0
        %437 = vmatpush1.bf16.msra.mxu0 0
        %438 = vmatprep.subr.bf16.mxu0 0
        %439 = vmatpush1.bf16.msra.mxu0 0
        %440 = vmatprep.subr.bf16.mxu0 0
        %441 = vmatpush1.bf16.msra.mxu0 0
        %442 = vmatprep.subr.bf16.mxu0 0
        %443 = vmatpush1.bf16.msra.mxu0 0
        %444 = vmatprep.subr.bf16.mxu0 0
        %445 = vmatpush1.bf16.msra.mxu0 0
        %446 = vmatprep.subr.bf16.mxu0 0
        %447 = vmatpush1.bf16.msra.mxu0 0
        %448 = vmatprep.subr.bf16.mxu0 0
        %449 = vmatpush1.bf16.msra.mxu0 0
        %450 = vmatprep.subr.bf16.mxu0 0
        %451 = vmatpush1.bf16.msra.mxu0 0
        %452 = vmatprep.subr.bf16.mxu0 0
        %453 = vmatpush1.bf16.msra.mxu0 0
        %454 = vmatprep.subr.bf16.mxu0 0
        %455 = vmatpush1.bf16.msra.mxu0 0
        %456 = vmatprep.mubr.bf16.mxu0 0
        %457 = vmatmul.mubr.bf16.gmra.mrb[0].mxu0 %v419
        %v458 = vpop.f32.mrb[0].mxu0
        %v459 = vadd.f32 %v404, %v458
        %v460 = vpop.f32.mrb[0].mxu0
        %v461 = vpop.f32.mrb[0].mxu0
        %v462 = vadd.f32 %v404, %v461
        %v463 = vpop.f32.mrb[0].mxu0
        %464 = vmatprep.mubr.bf16.mxu0 0
        %465 = vmatmul.mubr.bf16.gmra.mrb[0].mxu0 %v422
        %v466 = vpop.f32.mrb[0].mxu0
        %v467 = vadd.f32 %v404, %v466
        %v468 = vpop.f32.mrb[0].mxu0
        %v469 = vpop.f32.mrb[0].mxu0
        %v470 = vadd.f32 %v404, %v469
        %v471 = vpop.f32.mrb[0].mxu0
        %472 = vdwg.mxu0
        %v473 = vmax.f32 %v459, 0.0
        %v474 = vmax.f32 %v462, 0.0
        %v475 = vmax.f32 %v467, 0.0
        %v476 = vmax.f32 %v470, 0.0
        %v477 = vpack.c.bf16 %v474, %v473
        %v478 = vpack.c.bf16 %v476, %v475
        %v479 = vld [vmem:[%s5] sm:$0xf]
        %v480 = vld [vmem:[%s5 + $0x4] sm:$0xf]
        %v481 = vld [vmem:[%s5 + $0x8] sm:$0xf]
        %v482 = vld [vmem:[%s5 + $0xc] sm:$0xf]
        %v483 = vld [vmem:[%s5 + $0x10] sm:$0xf]
        %v484 = vld [vmem:[%s5 + $0x14] sm:$0xf]
        %v485 = vld [vmem:[%s5 + $0x18] sm:$0xf]
        %v486 = vld [vmem:[%s5 + $0x1c] sm:$0xf]
        %v487 = vld [vmem:[%s6] sm:$0x1]
        %v489 = vlaneseq
        %v490 = vshrl.u32 %v489, 7
        %v491 = vsub.s32 0, %v490
        %v492 = vrot.slane %v487, %v491
        %v502 = vunpack.c.l.b16 %v479
        %v503 = vunpack.c.l.b16 %v480
        %v504 = vunpack.c.l.b16 %v481
        %v505 = vunpack.c.l.b16 %v482
        %v506 = vunpack.c.l.b16 %v483
        %v507 = vunpack.c.l.b16 %v484
        %v508 = vunpack.c.l.b16 %v485
        %v509 = vunpack.c.l.b16 %v486
        %v510 = vpack.c.b16 %v503, %v502
        %v511 = vpack.c.b16 %v505, %v504
        %v512 = vpack.c.b16 %v507, %v506
        %v513 = vpack.c.b16 %v509, %v508
        %vm518 = vcmask 523264
        %v520 = vsel %vm518, %v477, 0
        %v523 = vsel %vm518, %v478, 0
        %525 = vmatprep.subr.bf16.mxu0 0
        %526 = vmatpush1.bf16.msra.mxu0 %v510
        %527 = vmatprep.subr.bf16.mxu0 0
        %528 = vmatpush1.bf16.msra.mxu0 %v511
        %529 = vmatprep.subr.bf16.mxu0 0
        %530 = vmatpush1.bf16.msra.mxu0 %v512
        %531 = vmatprep.subr.bf16.mxu0 0
        %532 = vmatpush1.bf16.msra.mxu0 %v513
        %533 = vmatprep.subr.bf16.mxu0 0
        %534 = vmatpush1.bf16.msra.mxu0 0
        %535 = vmatprep.subr.bf16.mxu0 0
        %536 = vmatpush1.bf16.msra.mxu0 0
        %537 = vmatprep.subr.bf16.mxu0 0
        %538 = vmatpush1.bf16.msra.mxu0 0
        %539 = vmatprep.subr.bf16.mxu0 0
        %540 = vmatpush1.bf16.msra.mxu0 0
        %541 = vmatprep.subr.bf16.mxu0 0
        %542 = vmatpush1.bf16.msra.mxu0 0
        %543 = vmatprep.subr.bf16.mxu0 0
        %544 = vmatpush1.bf16.msra.mxu0 0
        %545 = vmatprep.subr.bf16.mxu0 0
        %546 = vmatpush1.bf16.msra.mxu0 0
        %547 = vmatprep.subr.bf16.mxu0 0
        %548 = vmatpush1.bf16.msra.mxu0 0
        %549 = vmatprep.subr.bf16.mxu0 0
        %550 = vmatpush1.bf16.msra.mxu0 0
        %551 = vmatprep.subr.bf16.mxu0 0
        %552 = vmatpush1.bf16.msra.mxu0 0
        %553 = vmatprep.subr.bf16.mxu0 0
        %554 = vmatpush1.bf16.msra.mxu0 0
        %555 = vmatprep.subr.bf16.mxu0 0
        %556 = vmatpush1.bf16.msra.mxu0 0
        %557 = vmatprep.mubr.bf16.mxu0 0
        %558 = vmatmul.mubr.bf16.gmra.mrb[0].mxu0 %v520
        %v559 = vpop.f32.mrb[0].mxu0
        %v560 = vadd.f32 %v492, %v559
        %v561 = vpop.f32.mrb[0].mxu0
        %v562 = vpop.f32.mrb[0].mxu0
        %v563 = vadd.f32 %v492, %v562
        %v564 = vpop.f32.mrb[0].mxu0
        %565 = vmatprep.mubr.bf16.mxu0 0
        %566 = vmatmul.mubr.bf16.gmra.mrb[0].mxu0 %v523
        %v567 = vpop.f32.mrb[0].mxu0
        %v568 = vadd.f32 %v492, %v567
        %v569 = vpop.f32.mrb[0].mxu0
        %v570 = vpop.f32.mrb[0].mxu0
        %v571 = vadd.f32 %v492, %v570
        %v572 = vpop.f32.mrb[0].mxu0
        %573 = vdwg.mxu0
        %574 = vst [vmem:[%s287] sm:$0xff] %v560
        %575 = vst [vmem:[%s287 + $0x8] sm:$0xff] %v563
        %576 = vst [vmem:[%s287 + $0x10] sm:$0xff] %v568
        %577 = vst [vmem:[%s287 + $0x18] sm:$0xff] %v571
        %s578 = sand.u32 %s182, 1
        %s579 = scalar_lea.sflag [#allocation4], %s578
        %s580 = sand.u32 %s182, 1
        %s581 = smul.addr %s580, 32
        %s582 = scalar_lea.vmem [#allocation5], %s581
        // Predicated region
        $region53: #{tpu_custom_call.1} parent=47 // pred_check
          %p583 = pneg %p192
        $region54: #{tpu_custom_call.1} parent=47 // pred_check_branch
          %585 = sbr.rel (%p583) target = $region56
        $region55: #{tpu_custom_call.1} parent=47 // pred_region
          %s586 = smul.u32 4, %s22
          %s588 = ssub.s32 512, 512
          %589 = vsyncadd %s579, %s588
          %s590 = smul.addr %s586, 128
          %s591 = scalar_lea.hbm %s7, %s590
          %s592 = sshll.u32 %s582, 4
          %s593 = int_to_ptr.vmem [resolvable:$true] %s592
          %598 = dma.vmem_to_hbm [thread:$0]  %s593, 512, %s591, %s579, 128, 128, 8
        $region56: #{tpu_custom_call.1} parent=47 // pred_fallthru
          _
      $region48: #{tpu_custom_call.1} parent=5 // pred_fallthru
        _
      %p599 = scmp.le.s32.totalorder 2, %s17
      // Predicated region
      $region57: #{tpu_custom_call.1} parent=5 // pred_check
        %p600 = pneg %p599
      $region58: #{tpu_custom_call.1} parent=5 // pred_check_branch
        %602 = sbr.rel (%p600) target = $region60
      $region59: #{tpu_custom_call.1} parent=5 // pred_region
        %s603 = ssub.s32 %s17, 2
        // Predicated region
        $region61: #{tpu_custom_call.1} parent=59 // pred_check
          %p604 = pneg %p198
        $region62: #{tpu_custom_call.1} parent=59 // pred_check_branch
          %606 = sbr.rel (%p604) target = $region64
        $region63: #{tpu_custom_call.1} parent=59 // pred_region
          %s607 = sand.u32 %s183, 1
          %s608 = scalar_lea.sflag [#allocation4], %s607
          %s609 = sand.u32 %s183, 1
          %s610 = smul.addr %s609, 32
          %s611 = scalar_lea.vmem [#allocation5], %s610
          %612 = dma.done %s608, 512
        $region64: #{tpu_custom_call.1} parent=59 // pred_fallthru
          _
      $region60: #{tpu_custom_call.1} parent=5 // pred_fallthru
        _
    $region6: #{tpu_custom_call.1} parent=1 // loop_footer
      %s21 = sadd.s32 1, %s17
    $region7: #{tpu_custom_call.1} parent=1 // loop_footer_branch
      %16 = sbr.rel target = $region3
    $region8: #{tpu_custom_call.1} parent=1 // loop_exit
      _
    %613 = vsyncpa [#allocation3], 1
    %s614 = scalar_lea.sflag [#allocation3], 1
    %615 = vsyncpa %s614, 1
    %616 = vsyncpa [#allocation4], 1
    %s617 = scalar_lea.sflag [#allocation4], 1
    %618 = vsyncpa %s617, 1

</llo_original>
